<compile_context>
chip_gen: v7x
topology: tpu7x:2x2x1
jax: 0.10.0
libtpu: 0.0.40
codegen_flags: <defaults>
</compile_context>

<pallas_src>
import jax
import jax.numpy as jnp
from jax.experimental import pallas as pl
from jax.experimental.pallas import tpu as pltpu

INPUT_SHAPE = 773
HIDDEN = (12, 8, 4, 8, 12, INPUT_SHAPE)       # output dims of the 6 Linear layers


def _round_up(n, m):
    return ((n + m - 1) // m) * m


def _autoencoder_kernel(x_ref,
                        w1_ref, b1_ref, w2_ref, b2_ref, w3_ref, b3_ref,
                        w4_ref, b4_ref, w5_ref, b5_ref, w6_ref, b6_ref,
                        out_ref):
    cdt = w1_ref.dtype                      # MXU feed dtype (f32 or bf16 stream)
    x = x_ref[...].astype(cdt)

    # ---- encoder ----
    h = jnp.dot(x, w1_ref[...], preferred_element_type=jnp.float32) + b1_ref[...]
    h = jnp.maximum(h, 0.0)                                   # ReLU
    h = jnp.dot(h.astype(cdt), w2_ref[...],
                preferred_element_type=jnp.float32) + b2_ref[...]
    h = jnp.maximum(h, 0.0)                                   # ReLU
    z = jnp.dot(h.astype(cdt), w3_ref[...],
                preferred_element_type=jnp.float32) + b3_ref[...]

    # ---- decoder ----
    d = jnp.dot(z.astype(cdt), w4_ref[...],
                preferred_element_type=jnp.float32) + b4_ref[...]
    d = jnp.maximum(d, 0.0)                                   # ReLU
    d = jnp.dot(d.astype(cdt), w5_ref[...],
                preferred_element_type=jnp.float32) + b5_ref[...]
    d = jnp.maximum(d, 0.0)                                   # ReLU
    d = jnp.dot(d.astype(cdt), w6_ref[...],
                preferred_element_type=jnp.float32) + b6_ref[...]

    # Exact sigmoid (exp lands on the EUP). On v5e/v6e this is hidden under the
    # HBM stream; kept exact for numerics rather than pl.reciprocal(approx=True).
    out_ref[...] = jax.nn.sigmoid(d).astype(out_ref.dtype)


def _choose_tile_batch(B, tile_batch):
    """Sublane-aligned batch tile; >=2 grid steps when possible (v7x megacore)."""
    if B <= 8:
        return B                              # block == full batch dim, grid = 1
    if B <= 2 * tile_batch:
        tb = _round_up(pl.cdiv(B, 2), 8)      # split batch across 2 TCs on v7x
    else:
        tb = tile_batch
    return max(8, min(tb, _round_up(B, 8)))


def autoencoder_forward(x, params, *, tile_batch=512, stream_dtype=jnp.float32):
    """x: (B, 773). params: flat list [w1, b1, ..., w6, b6] with w: (in, out), b: (1, out)."""
    B, F = x.shape
    assert F == INPUT_SHAPE

    TB = _choose_tile_batch(B, tile_batch)
    grid = (pl.cdiv(B, TB),)                  # last partial block is OOB-masked

    w1, b1, w2, b2, w3, b3, w4, b4, w5, b5, w6, b6 = params
    ws = [w.astype(stream_dtype) for w in (w1, w2, w3, w4, w5, w6)]
    bs = [b.astype(jnp.float32) for b in (b1, b2, b3, b4, b5, b6)]   # added to f32 acc
    kparams = [ws[0], bs[0], ws[1], bs[1], ws[2], bs[2],
               ws[3], bs[3], ws[4], bs[4], ws[5], bs[5]]

    x_in = x.astype(stream_dtype)

    # x/out tiled along batch; weights/biases VMEM-resident (constant index_map).
    x_spec = pl.BlockSpec((TB, INPUT_SHAPE), lambda i: (i, 0))
    out_spec = pl.BlockSpec((TB, INPUT_SHAPE), lambda i: (i, 0))
    param_specs = [pl.BlockSpec(p.shape, lambda i: (0, 0)) for p in kparams]

    itemsize = jnp.dtype(stream_dtype).itemsize
    flops = 2 * B * (INPUT_SHAPE * 12 + 12 * 8 + 8 * 4 + 4 * 8 + 8 * 12
                     + 12 * INPUT_SHAPE)
    bytes_accessed = (2 * B * INPUT_SHAPE * itemsize
                      + sum(int(p.size) * jnp.dtype(p.dtype).itemsize
                            for p in kparams))

    out = pl.pallas_call(
        _autoencoder_kernel,
        out_shape=jax.ShapeDtypeStruct((B, INPUT_SHAPE), stream_dtype),
        grid=grid,
        in_specs=[x_spec] + param_specs,
        out_specs=out_spec,
        compiler_params=pltpu.CompilerParams(
            dimension_semantics=("parallel",)),   # v7x: shard batch over 2 TCs
        cost_estimate=pl.CostEstimate(
            flops=flops,
            transcendentals=B * INPUT_SHAPE,      # sigmoid
            bytes_accessed=bytes_accessed),
    )(x_in, *kparams)

    return out


def init_params(key):
    """Deterministic init mimicking PyTorch Linear default U(-1/sqrt(in), 1/sqrt(in))."""
    dims_in = (INPUT_SHAPE,) + HIDDEN[:-1]
    dims_out = HIDDEN
    params = []
    for din, dout in zip(dims_in, dims_out):
        key, kw, kb = jax.random.split(key, 3)
        bound = 1.0 / jnp.sqrt(jnp.float32(din))
        w = jax.random.uniform(kw, (din, dout), jnp.float32, -bound, bound)
        b = jax.random.uniform(kb, (1, dout), jnp.float32, -bound, bound)
        params += [w, b]
    return params


def reference_forward(x, params):
    """Plain-JAX reference: Linear+ReLU x2, Linear (bottleneck), Linear+ReLU x2, Linear, Sigmoid."""
    h = x
    n_layers = len(params) // 2
    for i in range(n_layers):
        w, b = params[2 * i], params[2 * i + 1]
        h = h @ w + b
        if i < n_layers - 1 and i != 2:   # ReLU after layers 0,1,3,4 (not after bottleneck)
            h = jnp.maximum(h, 0.0)
    return jax.nn.sigmoid(h)


if __name__ == "__main__":
    key = jax.random.PRNGKey(0)
    key, kx = jax.random.split(key)
    params = init_params(key)

    # Small batch: single grid step, block == full batch dim.
    B = 4
    x = jax.random.normal(kx, (B, INPUT_SHAPE), jnp.float32)
    out = jax.block_until_ready(autoencoder_forward(x, params))
    ref = reference_forward(x, params)
    assert out.shape == (B, INPUT_SHAPE)
    assert jnp.allclose(out, ref, atol=1e-5, rtol=1e-5), "mismatch vs reference (f32)"

    # Larger batch: multi-step grid + OOB-masked partial last block (TB=16, grid=2).
    key, kx2 = jax.random.split(key)
    B2 = 20
    x2 = jax.random.normal(kx2, (B2, INPUT_SHAPE), jnp.float32)
    out2 = jax.block_until_ready(autoencoder_forward(x2, params))
    ref2 = reference_forward(x2, params)
    assert out2.shape == (B2, INPUT_SHAPE)
    assert jnp.allclose(out2, ref2, atol=1e-5, rtol=1e-5), "mismatch vs reference (partial block)"

    # bf16-streamed variant: halves HBM bytes on the dominant x/out streams,
    # f32 MXU accumulation; looser tolerance vs the f32 reference.
    out_bf16 = jax.block_until_ready(
        autoencoder_forward(x, params, stream_dtype=jnp.bfloat16))
    assert jnp.allclose(out_bf16.astype(jnp.float32), ref, atol=5e-2, rtol=0), \
        "mismatch vs reference (bf16 streams)"

    print("KERNEL_OK")
</pallas_src>

<mosaic_0001>
module attributes {stable_mosaic.version = 11 : i64} {
  func.func @_autoencoder_kernel(%arg0: i32, %arg1: memref<4x773xf32, #tpu.memory_space<vmem>>, %arg2: memref<773x12xf32, #tpu.memory_space<vmem>>, %arg3: memref<1x12xf32, #tpu.memory_space<vmem>>, %arg4: memref<12x8xf32, #tpu.memory_space<vmem>>, %arg5: memref<1x8xf32, #tpu.memory_space<vmem>>, %arg6: memref<8x4xf32, #tpu.memory_space<vmem>>, %arg7: memref<1x4xf32, #tpu.memory_space<vmem>>, %arg8: memref<4x8xf32, #tpu.memory_space<vmem>>, %arg9: memref<1x8xf32, #tpu.memory_space<vmem>>, %arg10: memref<8x12xf32, #tpu.memory_space<vmem>>, %arg11: memref<1x12xf32, #tpu.memory_space<vmem>>, %arg12: memref<12x773xf32, #tpu.memory_space<vmem>>, %arg13: memref<1x773xf32, #tpu.memory_space<vmem>>, %arg14: memref<4x773xf32, #tpu.memory_space<vmem>>) attributes {dimension_semantics = [#tpu.dimension_semantics<parallel>], iteration_bounds = array<i64: 1>, scalar_prefetch = 0 : i64, scratch_operands = 0 : i64, tpu.core_type = #tpu.core_type<tc>, window_params = [{transform_indices = @transform_0, window_bounds = array<i64: 4, 773>}, {pipeline_mode = #tpu.pipeline_mode<synchronous>, transform_indices = @transform_1, window_bounds = array<i64: 773, 12>}, {pipeline_mode = #tpu.pipeline_mode<synchronous>, transform_indices = @transform_2, window_bounds = array<i64: 1, 12>}, {pipeline_mode = #tpu.pipeline_mode<synchronous>, transform_indices = @transform_3, window_bounds = array<i64: 12, 8>}, {pipeline_mode = #tpu.pipeline_mode<synchronous>, transform_indices = @transform_4, window_bounds = array<i64: 1, 8>}, {pipeline_mode = #tpu.pipeline_mode<synchronous>, transform_indices = @transform_5, window_bounds = array<i64: 8, 4>}, {pipeline_mode = #tpu.pipeline_mode<synchronous>, transform_indices = @transform_6, window_bounds = array<i64: 1, 4>}, {pipeline_mode = #tpu.pipeline_mode<synchronous>, transform_indices = @transform_7, window_bounds = array<i64: 4, 8>}, {pipeline_mode = #tpu.pipeline_mode<synchronous>, transform_indices = @transform_8, window_bounds = array<i64: 1, 8>}, {pipeline_mode = #tpu.pipeline_mode<synchronous>, transform_indices = @transform_9, window_bounds = array<i64: 8, 12>}, {pipeline_mode = #tpu.pipeline_mode<synchronous>, transform_indices = @transform_10, window_bounds = array<i64: 1, 12>}, {pipeline_mode = #tpu.pipeline_mode<synchronous>, transform_indices = @transform_11, window_bounds = array<i64: 12, 773>}, {pipeline_mode = #tpu.pipeline_mode<synchronous>, transform_indices = @transform_12, window_bounds = array<i64: 1, 773>}, {transform_indices = @transform_13, window_bounds = array<i64: 4, 773>}]} {
    %c0 = arith.constant 0 : index
    %c0_0 = arith.constant 0 : index
    %0 = vector.load %arg1[%c0, %c0_0] : memref<4x773xf32, #tpu.memory_space<vmem>>, vector<4x773xf32>
    %c0_1 = arith.constant 0 : index
    %c0_2 = arith.constant 0 : index
    %1 = vector.load %arg2[%c0_1, %c0_2] : memref<773x12xf32, #tpu.memory_space<vmem>>, vector<773x12xf32>
    %cst = arith.constant dense<0.000000e+00> : vector<4x12xf32>
    %2 = tpu.matmul %0, %1, %cst {dimension_numbers = #tpu.dot_dimension_numbers<[1], [0], [0], [1], [0, 0, 1, 1], [], []>} : vector<4x773xf32>, vector<773x12xf32>, vector<4x12xf32> -> vector<4x12xf32>
    %c0_3 = arith.constant 0 : index
    %c0_4 = arith.constant 0 : index
    %3 = vector.load %arg3[%c0_3, %c0_4] : memref<1x12xf32, #tpu.memory_space<vmem>>, vector<1x12xf32>
    %4 = vector.broadcast %3 : vector<1x12xf32> to vector<4x12xf32>
    %5 = arith.addf %2, %4 : vector<4x12xf32>
    %cst_5 = arith.constant 0.000000e+00 : f32
    %6 = vector.broadcast %cst_5 : f32 to vector<4x12xf32>
    %7 = arith.maximumf %5, %6 : vector<4x12xf32>
    %c0_6 = arith.constant 0 : index
    %c0_7 = arith.constant 0 : index
    %8 = vector.load %arg4[%c0_6, %c0_7] : memref<12x8xf32, #tpu.memory_space<vmem>>, vector<12x8xf32>
    %cst_8 = arith.constant dense<0.000000e+00> : vector<4x8xf32>
    %9 = tpu.matmul %7, %8, %cst_8 {dimension_numbers = #tpu.dot_dimension_numbers<[1], [0], [0], [1], [0, 0, 1, 1], [], []>} : vector<4x12xf32>, vector<12x8xf32>, vector<4x8xf32> -> vector<4x8xf32>
    %c0_9 = arith.constant 0 : index
    %c0_10 = arith.constant 0 : index
    %10 = vector.load %arg5[%c0_9, %c0_10] : memref<1x8xf32, #tpu.memory_space<vmem>>, vector<1x8xf32>
    %11 = vector.broadcast %10 : vector<1x8xf32> to vector<4x8xf32>
    %12 = arith.addf %9, %11 : vector<4x8xf32>
    %cst_11 = arith.constant 0.000000e+00 : f32
    %13 = vector.broadcast %cst_11 : f32 to vector<4x8xf32>
    %14 = arith.maximumf %12, %13 : vector<4x8xf32>
    %c0_12 = arith.constant 0 : index
    %c0_13 = arith.constant 0 : index
    %15 = vector.load %arg6[%c0_12, %c0_13] : memref<8x4xf32, #tpu.memory_space<vmem>>, vector<8x4xf32>
    %cst_14 = arith.constant dense<0.000000e+00> : vector<4x4xf32>
    %16 = tpu.matmul %14, %15, %cst_14 {dimension_numbers = #tpu.dot_dimension_numbers<[1], [0], [0], [1], [0, 0, 1, 1], [], []>} : vector<4x8xf32>, vector<8x4xf32>, vector<4x4xf32> -> vector<4x4xf32>
    %c0_15 = arith.constant 0 : index
    %c0_16 = arith.constant 0 : index
    %17 = vector.load %arg7[%c0_15, %c0_16] : memref<1x4xf32, #tpu.memory_space<vmem>>, vector<1x4xf32>
    %18 = vector.broadcast %17 : vector<1x4xf32> to vector<4x4xf32>
    %19 = arith.addf %16, %18 : vector<4x4xf32>
    %c0_17 = arith.constant 0 : index
    %c0_18 = arith.constant 0 : index
    %20 = vector.load %arg8[%c0_17, %c0_18] : memref<4x8xf32, #tpu.memory_space<vmem>>, vector<4x8xf32>
    %cst_19 = arith.constant dense<0.000000e+00> : vector<4x8xf32>
    %21 = tpu.matmul %19, %20, %cst_19 {dimension_numbers = #tpu.dot_dimension_numbers<[1], [0], [0], [1], [0, 0, 1, 1], [], []>} : vector<4x4xf32>, vector<4x8xf32>, vector<4x8xf32> -> vector<4x8xf32>
    %c0_20 = arith.constant 0 : index
    %c0_21 = arith.constant 0 : index
    %22 = vector.load %arg9[%c0_20, %c0_21] : memref<1x8xf32, #tpu.memory_space<vmem>>, vector<1x8xf32>
    %23 = vector.broadcast %22 : vector<1x8xf32> to vector<4x8xf32>
    %24 = arith.addf %21, %23 : vector<4x8xf32>
    %cst_22 = arith.constant 0.000000e+00 : f32
    %25 = vector.broadcast %cst_22 : f32 to vector<4x8xf32>
    %26 = arith.maximumf %24, %25 : vector<4x8xf32>
    %c0_23 = arith.constant 0 : index
    %c0_24 = arith.constant 0 : index
    %27 = vector.load %arg10[%c0_23, %c0_24] : memref<8x12xf32, #tpu.memory_space<vmem>>, vector<8x12xf32>
    %cst_25 = arith.constant dense<0.000000e+00> : vector<4x12xf32>
    %28 = tpu.matmul %26, %27, %cst_25 {dimension_numbers = #tpu.dot_dimension_numbers<[1], [0], [0], [1], [0, 0, 1, 1], [], []>} : vector<4x8xf32>, vector<8x12xf32>, vector<4x12xf32> -> vector<4x12xf32>
    %c0_26 = arith.constant 0 : index
    %c0_27 = arith.constant 0 : index
    %29 = vector.load %arg11[%c0_26, %c0_27] : memref<1x12xf32, #tpu.memory_space<vmem>>, vector<1x12xf32>
    %30 = vector.broadcast %29 : vector<1x12xf32> to vector<4x12xf32>
    %31 = arith.addf %28, %30 : vector<4x12xf32>
    %cst_28 = arith.constant 0.000000e+00 : f32
    %32 = vector.broadcast %cst_28 : f32 to vector<4x12xf32>
    %33 = arith.maximumf %31, %32 : vector<4x12xf32>
    %c0_29 = arith.constant 0 : index
    %c0_30 = arith.constant 0 : index
    %34 = vector.load %arg12[%c0_29, %c0_30] : memref<12x773xf32, #tpu.memory_space<vmem>>, vector<12x773xf32>
    %cst_31 = arith.constant dense<0.000000e+00> : vector<4x773xf32>
    %35 = tpu.matmul %33, %34, %cst_31 {dimension_numbers = #tpu.dot_dimension_numbers<[1], [0], [0], [1], [0, 0, 1, 1], [], []>} : vector<4x12xf32>, vector<12x773xf32>, vector<4x773xf32> -> vector<4x773xf32>
    %c0_32 = arith.constant 0 : index
    %c0_33 = arith.constant 0 : index
    %36 = vector.load %arg13[%c0_32, %c0_33] : memref<1x773xf32, #tpu.memory_space<vmem>>, vector<1x773xf32>
    %37 = vector.broadcast %36 : vector<1x773xf32> to vector<4x773xf32>
    %38 = arith.addf %35, %37 : vector<4x773xf32>
    %39 = arith.negf %38 : vector<4x773xf32>
    %40 = math.exp %39 : vector<4x773xf32>
    %cst_34 = arith.constant 1.000000e+00 : f32
    %41 = vector.broadcast %cst_34 : f32 to vector<4x773xf32>
    %42 = arith.addf %41, %40 : vector<4x773xf32>
    %43 = arith.divf %41, %42 : vector<4x773xf32>
    %c0_35 = arith.constant 0 : index
    %c0_36 = arith.constant 0 : index
    %44 = vector.load %arg14[%c0_35, %c0_36] : memref<4x773xf32, #tpu.memory_space<vmem>>, vector<4x773xf32>
    tpu.vector_store %arg14[%c0_35, %c0_36], %43 {strides = array<i32>} : memref<4x773xf32, #tpu.memory_space<vmem>>, vector<4x773xf32>,
    return
  }
  func.func @transform_0(%arg0: i32) -> (i32, i32) {
    %c0_i32 = arith.constant 0 : i32
    %c0_i32_0 = arith.constant 0 : i32
    return %arg0, %c0_i32 : i32, i32
  }
  func.func @transform_1(%arg0: i32) -> (i32, i32) {
    %c0_i32 = arith.constant 0 : i32
    %c0_i32_0 = arith.constant 0 : i32
    %c0_i32_1 = arith.constant 0 : i32
    return %c0_i32, %c0_i32_0 : i32, i32
  }
  func.func @transform_2(%arg0: i32) -> (i32, i32) {
    %c0_i32 = arith.constant 0 : i32
    %c0_i32_0 = arith.constant 0 : i32
    %c0_i32_1 = arith.constant 0 : i32
    return %c0_i32, %c0_i32_0 : i32, i32
  }
  func.func @transform_3(%arg0: i32) -> (i32, i32) {
    %c0_i32 = arith.constant 0 : i32
    %c0_i32_0 = arith.constant 0 : i32
    %c0_i32_1 = arith.constant 0 : i32
    return %c0_i32, %c0_i32_0 : i32, i32
  }
  func.func @transform_4(%arg0: i32) -> (i32, i32) {
    %c0_i32 = arith.constant 0 : i32
    %c0_i32_0 = arith.constant 0 : i32
    %c0_i32_1 = arith.constant 0 : i32
    return %c0_i32, %c0_i32_0 : i32, i32
  }
  func.func @transform_5(%arg0: i32) -> (i32, i32) {
    %c0_i32 = arith.constant 0 : i32
    %c0_i32_0 = arith.constant 0 : i32
    %c0_i32_1 = arith.constant 0 : i32
    return %c0_i32, %c0_i32_0 : i32, i32
  }
  func.func @transform_6(%arg0: i32) -> (i32, i32) {
    %c0_i32 = arith.constant 0 : i32
    %c0_i32_0 = arith.constant 0 : i32
    %c0_i32_1 = arith.constant 0 : i32
    return %c0_i32, %c0_i32_0 : i32, i32
  }
  func.func @transform_7(%arg0: i32) -> (i32, i32) {
    %c0_i32 = arith.constant 0 : i32
    %c0_i32_0 = arith.constant 0 : i32
    %c0_i32_1 = arith.constant 0 : i32
    return %c0_i32, %c0_i32_0 : i32, i32
  }
  func.func @transform_8(%arg0: i32) -> (i32, i32) {
    %c0_i32 = arith.constant 0 : i32
    %c0_i32_0 = arith.constant 0 : i32
    %c0_i32_1 = arith.constant 0 : i32
    return %c0_i32, %c0_i32_0 : i32, i32
  }
  func.func @transform_9(%arg0: i32) -> (i32, i32) {
    %c0_i32 = arith.constant 0 : i32
    %c0_i32_0 = arith.constant 0 : i32
    %c0_i32_1 = arith.constant 0 : i32
    return %c0_i32, %c0_i32_0 : i32, i32
  }
  func.func @transform_10(%arg0: i32) -> (i32, i32) {
    %c0_i32 = arith.constant 0 : i32
    %c0_i32_0 = arith.constant 0 : i32
    %c0_i32_1 = arith.constant 0 : i32
    return %c0_i32, %c0_i32_0 : i32, i32
  }
  func.func @transform_11(%arg0: i32) -> (i32, i32) {
    %c0_i32 = arith.constant 0 : i32
    %c0_i32_0 = arith.constant 0 : i32
    %c0_i32_1 = arith.constant 0 : i32
    return %c0_i32, %c0_i32_0 : i32, i32
  }
  func.func @transform_12(%arg0: i32) -> (i32, i32) {
    %c0_i32 = arith.constant 0 : i32
    %c0_i32_0 = arith.constant 0 : i32
    %c0_i32_1 = arith.constant 0 : i32
    return %c0_i32, %c0_i32_0 : i32, i32
  }
  func.func @transform_13(%arg0: i32) -> (i32, i32) {
    %c0_i32 = arith.constant 0 : i32
    %c0_i32_0 = arith.constant 0 : i32
    return %arg0, %c0_i32 : i32, i32
  }
}

</mosaic_0001>

<llo_original>
// kernel: tpu_custom_call.1
$region0: #{tpu_custom_call.1}
  #allocation0 [shape = 'u32[]', space=smem, size = 0x4, offset = 0x4, fixed_abs, tag = 'smem constant byte address 0x4 - core index']
  #allocation1 [shape = 'u32[144,128]{1,0:T(1,128)}', space=vmem, size = 0x12000, scoped, tag = 'internal scratch']
  %s0 = inlined_call_operand.vmem [shape: f32[4,773], index: 0, kind: input, shape index: {}]
  %s1 = inlined_call_operand.vmem [shape: f32[773,12], index: 1, kind: input, shape index: {}]
  %s2 = inlined_call_operand.vmem [shape: f32[1,12], index: 2, kind: input, shape index: {}]
  %s3 = inlined_call_operand.vmem [shape: f32[12,8], index: 3, kind: input, shape index: {}]
  %s4 = inlined_call_operand.vmem [shape: f32[1,8], index: 4, kind: input, shape index: {}]
  %s5 = inlined_call_operand.vmem [shape: f32[8,4], index: 5, kind: input, shape index: {}]
  %s6 = inlined_call_operand.vmem [shape: f32[1,4], index: 6, kind: input, shape index: {}]
  %s7 = inlined_call_operand.vmem [shape: f32[4,8], index: 7, kind: input, shape index: {}]
  %s8 = inlined_call_operand.vmem [shape: f32[1,8], index: 8, kind: input, shape index: {}]
  %s9 = inlined_call_operand.vmem [shape: f32[8,12], index: 9, kind: input, shape index: {}]
  %s10 = inlined_call_operand.vmem [shape: f32[1,12], index: 10, kind: input, shape index: {}]
  %s11 = inlined_call_operand.vmem [shape: f32[12,773], index: 11, kind: input, shape index: {}]
  %s12 = inlined_call_operand.vmem [shape: f32[1,773], index: 12, kind: input, shape index: {}]
  %s13 = inlined_call_operand.hbm [shape: f32[4,773], index: 13, kind: output, shape index: {}]
  %s14 = sld [smem:[#allocation0]]
  $region62: #{tpu_custom_call.1} parent=0
    _
  %s16 = ssub.s32 1, %s14
  %s17 = scalar_select 0, %s16, %s14
  $region1: #{tpu_custom_call.1} parent=0
    #allocation2 [shape = 'u8[14336]{0}', space=vmem, size = 0x3800, scoped, tag = 'output window, operand 0, single buffered']
    #allocation3 [shape = 's32[1]{0}', space=sflag, size = 0x4, scoped, tag = 'scoped memory for tpu_custom_call.1']
    %18 = vsyncpa [#allocation3], 0
    // Predicated region
    $region2: #{tpu_custom_call.1} parent=1 // pred_check
      _
    $region3: #{tpu_custom_call.1} parent=1 // pred_check_branch
      %20 = sbr.rel (0) target = $region5
    $region4: #{tpu_custom_call.1} parent=1 // pred_region
      _
    $region5: #{tpu_custom_call.1} parent=1 // pred_fallthru
      _
    // Predicated region
    $region6: #{tpu_custom_call.1} parent=1 // pred_check
      _
    $region7: #{tpu_custom_call.1} parent=1 // pred_check_branch
      %22 = sbr.rel (0) target = $region9
    $region8: #{tpu_custom_call.1} parent=1 // pred_region
      _
    $region9: #{tpu_custom_call.1} parent=1 // pred_fallthru
      _
    // Predicated region
    $region10: #{tpu_custom_call.1} parent=1 // pred_check
      _
    $region11: #{tpu_custom_call.1} parent=1 // pred_check_branch
      %24 = sbr.rel (0) target = $region13
    $region12: #{tpu_custom_call.1} parent=1 // pred_region
      _
    $region13: #{tpu_custom_call.1} parent=1 // pred_fallthru
      _
    // Predicated region
    $region14: #{tpu_custom_call.1} parent=1 // pred_check
      _
    $region15: #{tpu_custom_call.1} parent=1 // pred_check_branch
      %26 = sbr.rel (0) target = $region17
    $region16: #{tpu_custom_call.1} parent=1 // pred_region
      _
    $region17: #{tpu_custom_call.1} parent=1 // pred_fallthru
      _
    // Predicated region
    $region18: #{tpu_custom_call.1} parent=1 // pred_check
      _
    $region19: #{tpu_custom_call.1} parent=1 // pred_check_branch
      %28 = sbr.rel (0) target = $region21
    $region20: #{tpu_custom_call.1} parent=1 // pred_region
      _
    $region21: #{tpu_custom_call.1} parent=1 // pred_fallthru
      _
    // Predicated region
    $region22: #{tpu_custom_call.1} parent=1 // pred_check
      _
    $region23: #{tpu_custom_call.1} parent=1 // pred_check_branch
      %30 = sbr.rel (0) target = $region25
    $region24: #{tpu_custom_call.1} parent=1 // pred_region
      _
    $region25: #{tpu_custom_call.1} parent=1 // pred_fallthru
      _
    // Predicated region
    $region26: #{tpu_custom_call.1} parent=1 // pred_check
      _
    $region27: #{tpu_custom_call.1} parent=1 // pred_check_branch
      %32 = sbr.rel (0) target = $region29
    $region28: #{tpu_custom_call.1} parent=1 // pred_region
      _
    $region29: #{tpu_custom_call.1} parent=1 // pred_fallthru
      _
    // Predicated region
    $region30: #{tpu_custom_call.1} parent=1 // pred_check
      _
    $region31: #{tpu_custom_call.1} parent=1 // pred_check_branch
      %34 = sbr.rel (0) target = $region33
    $region32: #{tpu_custom_call.1} parent=1 // pred_region
      _
    $region33: #{tpu_custom_call.1} parent=1 // pred_fallthru
      _
    // Predicated region
    $region34: #{tpu_custom_call.1} parent=1 // pred_check
      _
    $region35: #{tpu_custom_call.1} parent=1 // pred_check_branch
      %36 = sbr.rel (0) target = $region37
    $region36: #{tpu_custom_call.1} parent=1 // pred_region
      _
    $region37: #{tpu_custom_call.1} parent=1 // pred_fallthru
      _
    // Predicated region
    $region38: #{tpu_custom_call.1} parent=1 // pred_check
      _
    $region39: #{tpu_custom_call.1} parent=1 // pred_check_branch
      %38 = sbr.rel (0) target = $region41
    $region40: #{tpu_custom_call.1} parent=1 // pred_region
      _
    $region41: #{tpu_custom_call.1} parent=1 // pred_fallthru
      _
    // Predicated region
    $region42: #{tpu_custom_call.1} parent=1 // pred_check
      _
    $region43: #{tpu_custom_call.1} parent=1 // pred_check_branch
      %40 = sbr.rel (0) target = $region45
    $region44: #{tpu_custom_call.1} parent=1 // pred_region
      _
    $region45: #{tpu_custom_call.1} parent=1 // pred_fallthru
      _
    // Predicated region
    $region46: #{tpu_custom_call.1} parent=1 // pred_check
      _
    $region47: #{tpu_custom_call.1} parent=1 // pred_check_branch
      %42 = sbr.rel (0) target = $region49
    $region48: #{tpu_custom_call.1} parent=1 // pred_region
      _
    $region49: #{tpu_custom_call.1} parent=1 // pred_fallthru
      _
    // Predicated region
    $region50: #{tpu_custom_call.1} parent=1 // pred_check
      _
    $region51: #{tpu_custom_call.1} parent=1 // pred_check_branch
      %44 = sbr.rel (0) target = $region53
    $region52: #{tpu_custom_call.1} parent=1 // pred_region
      _
    $region53: #{tpu_custom_call.1} parent=1 // pred_fallthru
      _
    %v45 = vld [vmem:[%s0] sm:$0xff]
    %v46 = vld [vmem:[%s0 + $0x8] sm:$0xff]
    %v47 = vld [vmem:[%s0 + $0x10] sm:$0xff]
    %v48 = vld [vmem:[%s0 + $0x18] sm:$0xf]
    %v49 = vld [vmem:[%s1] sm:$0xff]
    %v50 = vld [vmem:[%s1 + $0x8] sm:$0xff]
    %v51 = vld [vmem:[%s1 + $0x10] sm:$0xff]
    %v52 = vld [vmem:[%s1 + $0x18] sm:$0xff]
    %v53 = vld [vmem:[%s1 + $0x20] sm:$0xff]
    %v54 = vld [vmem:[%s1 + $0x28] sm:$0xff]
    %v55 = vld [vmem:[%s1 + $0x30] sm:$0xff]
    %v56 = vld [vmem:[%s1 + $0x38] sm:$0xff]
    %v57 = vld [vmem:[%s1 + $0x40] sm:$0xff]
    %v58 = vld [vmem:[%s1 + $0x48] sm:$0xff]
    %v59 = vld [vmem:[%s1 + $0x50] sm:$0xff]
    %v60 = vld [vmem:[%s1 + $0x58] sm:$0xff]
    %v61 = vld [vmem:[%s1 + $0x60] sm:$0xff]
    %v62 = vld [vmem:[%s1 + $0x68] sm:$0xff]
    %v63 = vld [vmem:[%s1 + $0x70] sm:$0xff]
    %v64 = vld [vmem:[%s1 + $0x78] sm:$0xff]
    %v65 = vld [vmem:[%s1 + $0x80] sm:$0xff]
    %v66 = vld [vmem:[%s1 + $0x88] sm:$0xff]
    %v67 = vld [vmem:[%s1 + $0x90] sm:$0xff]
    %v68 = vld [vmem:[%s1 + $0x98] sm:$0xff]
    %v69 = vld [vmem:[%s1 + $0xa0] sm:$0xff]
    %v70 = vld [vmem:[%s1 + $0xa8] sm:$0xff]
    %v71 = vld [vmem:[%s1 + $0xb0] sm:$0xff]
    %v72 = vld [vmem:[%s1 + $0xb8] sm:$0xff]
    %v73 = vld [vmem:[%s1 + $0xc0] sm:$0xff]
    %v74 = vld [vmem:[%s1 + $0xc8] sm:$0xff]
    %v75 = vld [vmem:[%s1 + $0xd0] sm:$0xff]
    %v76 = vld [vmem:[%s1 + $0xd8] sm:$0xff]
    %v77 = vld [vmem:[%s1 + $0xe0] sm:$0xff]
    %v78 = vld [vmem:[%s1 + $0xe8] sm:$0xff]
    %v79 = vld [vmem:[%s1 + $0xf0] sm:$0xff]
    %v80 = vld [vmem:[%s1 + $0xf8] sm:$0xff]
    %v81 = vld [vmem:[%s1 + $0x100] sm:$0xff]
    %v82 = vld [vmem:[%s1 + $0x108] sm:$0xff]
    %v83 = vld [vmem:[%s1 + $0x110] sm:$0xff]
    %v84 = vld [vmem:[%s1 + $0x118] sm:$0xff]
    %v85 = vld [vmem:[%s1 + $0x120] sm:$0xff]
    %v86 = vld [vmem:[%s1 + $0x128] sm:$0xff]
    %v87 = vld [vmem:[%s1 + $0x130] sm:$0xff]
    %v88 = vld [vmem:[%s1 + $0x138] sm:$0xff]
    %v89 = vld [vmem:[%s1 + $0x140] sm:$0xff]
    %v90 = vld [vmem:[%s1 + $0x148] sm:$0xff]
    %v91 = vld [vmem:[%s1 + $0x150] sm:$0xff]
    %v92 = vld [vmem:[%s1 + $0x158] sm:$0xff]
    %v93 = vld [vmem:[%s1 + $0x160] sm:$0xff]
    %v94 = vld [vmem:[%s1 + $0x168] sm:$0xff]
    %v95 = vld [vmem:[%s1 + $0x170] sm:$0xff]
    %v96 = vld [vmem:[%s1 + $0x178] sm:$0xff]
    %v97 = vld [vmem:[%s1 + $0x180] sm:$0xff]
    %v98 = vld [vmem:[%s1 + $0x188] sm:$0xff]
    %v99 = vld [vmem:[%s1 + $0x190] sm:$0xff]
    %v100 = vld [vmem:[%s1 + $0x198] sm:$0xff]
    %v101 = vld [vmem:[%s1 + $0x1a0] sm:$0xff]
    %v102 = vld [vmem:[%s1 + $0x1a8] sm:$0xff]
    %v103 = vld [vmem:[%s1 + $0x1b0] sm:$0xff]
    %v104 = vld [vmem:[%s1 + $0x1b8] sm:$0xff]
    %v105 = vld [vmem:[%s1 + $0x1c0] sm:$0xff]
    %v106 = vld [vmem:[%s1 + $0x1c8] sm:$0xff]
    %v107 = vld [vmem:[%s1 + $0x1d0] sm:$0xff]
    %v108 = vld [vmem:[%s1 + $0x1d8] sm:$0xff]
    %v109 = vld [vmem:[%s1 + $0x1e0] sm:$0xff]
    %v110 = vld [vmem:[%s1 + $0x1e8] sm:$0xff]
    %v111 = vld [vmem:[%s1 + $0x1f0] sm:$0xff]
    %v112 = vld [vmem:[%s1 + $0x1f8] sm:$0xff]
    %v113 = vld [vmem:[%s1 + $0x200] sm:$0xff]
    %v114 = vld [vmem:[%s1 + $0x208] sm:$0xff]
    %v115 = vld [vmem:[%s1 + $0x210] sm:$0xff]
    %v116 = vld [vmem:[%s1 + $0x218] sm:$0xff]
    %v117 = vld [vmem:[%s1 + $0x220] sm:$0xff]
    %v118 = vld [vmem:[%s1 + $0x228] sm:$0xff]
    %v119 = vld [vmem:[%s1 + $0x230] sm:$0xff]
    %v120 = vld [vmem:[%s1 + $0x238] sm:$0xff]
    %v121 = vld [vmem:[%s1 + $0x240] sm:$0xff]
    %v122 = vld [vmem:[%s1 + $0x248] sm:$0xff]
    %v123 = vld [vmem:[%s1 + $0x250] sm:$0xff]
    %v124 = vld [vmem:[%s1 + $0x258] sm:$0xff]
    %v125 = vld [vmem:[%s1 + $0x260] sm:$0xff]
    %v126 = vld [vmem:[%s1 + $0x268] sm:$0xff]
    %v127 = vld [vmem:[%s1 + $0x270] sm:$0xff]
    %v128 = vld [vmem:[%s1 + $0x278] sm:$0xff]
    %v129 = vld [vmem:[%s1 + $0x280] sm:$0xff]
    %v130 = vld [vmem:[%s1 + $0x288] sm:$0xff]
    %v131 = vld [vmem:[%s1 + $0x290] sm:$0xff]
    %v132 = vld [vmem:[%s1 + $0x298] sm:$0xff]
    %v133 = vld [vmem:[%s1 + $0x2a0] sm:$0xff]
    %v134 = vld [vmem:[%s1 + $0x2a8] sm:$0xff]
    %v135 = vld [vmem:[%s1 + $0x2b0] sm:$0xff]
    %v136 = vld [vmem:[%s1 + $0x2b8] sm:$0xff]
    %v137 = vld [vmem:[%s1 + $0x2c0] sm:$0xff]
    %v138 = vld [vmem:[%s1 + $0x2c8] sm:$0xff]
    %v139 = vld [vmem:[%s1 + $0x2d0] sm:$0xff]
    %v140 = vld [vmem:[%s1 + $0x2d8] sm:$0xff]
    %v141 = vld [vmem:[%s1 + $0x2e0] sm:$0xff]
    %v142 = vld [vmem:[%s1 + $0x2e8] sm:$0xff]
    %v143 = vld [vmem:[%s1 + $0x2f0] sm:$0xff]
    %v144 = vld [vmem:[%s1 + $0x2f8] sm:$0xff]
    %v145 = vld [vmem:[%s1 + $0x300] sm:$0x1f]
    %v146 = vld [vmem:[%s2] sm:$0x1]
    %v148 = vlaneseq
    %v149 = vshrl.u32 %v148, 7
    %v150 = vsub.s32 0, %v149
    %v151 = vrot.slane %v146, %v150
    %v157 = vcombine.high %v45, %v45
    %v158 = vcombine.high %v46, %v46
    %v159 = vcombine.high %v47, %v47
    %vm163 = vcmask 39936
    %v164 = vsel %vm163, %v48, 0
    %vm166 = vcmask 1044480
    %v168 = vsel %vm166, %v145, 0
    %170 = vmatprep.subr.mxu0 0.0
    %171 = vmatpush1.msra.mxu0 %v49
    %172 = vmatprep.subr.mxu0 0.0
    %173 = vmatpush1.msra.mxu0 %v50
    %174 = vmatprep.subr.mxu0 0.0
    %175 = vmatpush1.msra.mxu0 %v51
    %176 = vmatprep.subr.mxu0 0.0
    %177 = vmatpush1.msra.mxu0 %v52
    %178 = vmatprep.subr.mxu0 0.0
    %179 = vmatpush1.msra.mxu0 %v53
    %180 = vmatprep.subr.mxu0 0.0
    %181 = vmatpush1.msra.mxu0 %v54
    %182 = vmatprep.subr.mxu0 0.0
    %183 = vmatpush1.msra.mxu0 %v55
    %184 = vmatprep.subr.mxu0 0.0
    %185 = vmatpush1.msra.mxu0 %v56
    %186 = vmatprep.subr.mxu0 0.0
    %187 = vmatpush1.msra.mxu0 %v57
    %188 = vmatprep.subr.mxu0 0.0
    %189 = vmatpush1.msra.mxu0 %v58
    %190 = vmatprep.subr.mxu0 0.0
    %191 = vmatpush1.msra.mxu0 %v59
    %192 = vmatprep.subr.mxu0 0.0
    %193 = vmatpush1.msra.mxu0 %v60
    %194 = vmatprep.subr.mxu0 0.0
    %195 = vmatpush1.msra.mxu0 %v61
    %196 = vmatprep.subr.mxu0 0.0
    %197 = vmatpush1.msra.mxu0 %v62
    %198 = vmatprep.subr.mxu0 0.0
    %199 = vmatpush1.msra.mxu0 %v63
    %200 = vmatprep.subr.mxu0 0.0
    %201 = vmatpush1.msra.mxu0 %v64
    %202 = vmatprep.subr.mxu0 0.0
    %203 = vmatpush1.msra.mxu0 %v65
    %204 = vmatprep.subr.mxu0 0.0
    %205 = vmatpush1.msra.mxu0 %v66
    %206 = vmatprep.subr.mxu0 0.0
    %207 = vmatpush1.msra.mxu0 %v67
    %208 = vmatprep.subr.mxu0 0.0
    %209 = vmatpush1.msra.mxu0 %v68
    %210 = vmatprep.subr.mxu0 0.0
    %211 = vmatpush1.msra.mxu0 %v69
    %212 = vmatprep.subr.mxu0 0.0
    %213 = vmatpush1.msra.mxu0 %v70
    %214 = vmatprep.subr.mxu0 0.0
    %215 = vmatpush1.msra.mxu0 %v71
    %216 = vmatprep.subr.mxu0 0.0
    %217 = vmatpush1.msra.mxu0 %v72
    %218 = vmatprep.subr.mxu0 0.0
    %219 = vmatpush1.msra.mxu0 %v73
    %220 = vmatprep.subr.mxu0 0.0
    %221 = vmatpush1.msra.mxu0 %v74
    %222 = vmatprep.subr.mxu0 0.0
    %223 = vmatpush1.msra.mxu0 %v75
    %224 = vmatprep.subr.mxu0 0.0
    %225 = vmatpush1.msra.mxu0 %v76
    %226 = vmatprep.subr.mxu0 0.0
    %227 = vmatpush1.msra.mxu0 %v77
    %228 = vmatprep.subr.mxu0 0.0
    %229 = vmatpush1.msra.mxu0 %v78
    %230 = vmatprep.subr.mxu0 0.0
    %231 = vmatpush1.msra.mxu0 %v79
    %232 = vmatprep.subr.mxu0 0.0
    %233 = vmatpush1.msra.mxu0 %v80
    %234 = vmatprep.mubr.f32.mxu0 %v157
    %235 = vmatmul.mubr.f32.gmra.mrb[0].mxu0 %v45
    %v236 = vpop.f32.mrb[0].mxu0
    %v237 = vadd.f32 %v151, %v236
    %v238 = vpop.f32.mrb[0].mxu0
    %239 = vdwg.mxu0
    %240 = vmatprep.subr.mxu0 0.0
    %241 = vmatpush1.msra.mxu0 %v81
    %242 = vmatprep.subr.mxu0 0.0
    %243 = vmatpush1.msra.mxu0 %v82
    %244 = vmatprep.subr.mxu0 0.0
    %245 = vmatpush1.msra.mxu0 %v83
    %246 = vmatprep.subr.mxu0 0.0
    %247 = vmatpush1.msra.mxu0 %v84
    %248 = vmatprep.subr.mxu0 0.0
    %249 = vmatpush1.msra.mxu0 %v85
    %250 = vmatprep.subr.mxu0 0.0
    %251 = vmatpush1.msra.mxu0 %v86
    %252 = vmatprep.subr.mxu0 0.0
    %253 = vmatpush1.msra.mxu0 %v87
    %254 = vmatprep.subr.mxu0 0.0
    %255 = vmatpush1.msra.mxu0 %v88
    %256 = vmatprep.subr.mxu0 0.0
    %257 = vmatpush1.msra.mxu0 %v89
    %258 = vmatprep.subr.mxu0 0.0
    %259 = vmatpush1.msra.mxu0 %v90
    %260 = vmatprep.subr.mxu0 0.0
    %261 = vmatpush1.msra.mxu0 %v91
    %262 = vmatprep.subr.mxu0 0.0
    %263 = vmatpush1.msra.mxu0 %v92
    %264 = vmatprep.subr.mxu0 0.0
    %265 = vmatpush1.msra.mxu0 %v93
    %266 = vmatprep.subr.mxu0 0.0
    %267 = vmatpush1.msra.mxu0 %v94
    %268 = vmatprep.subr.mxu0 0.0
    %269 = vmatpush1.msra.mxu0 %v95
    %270 = vmatprep.subr.mxu0 0.0
    %271 = vmatpush1.msra.mxu0 %v96
    %272 = vmatprep.subr.mxu0 0.0
    %273 = vmatpush1.msra.mxu0 %v97
    %274 = vmatprep.subr.mxu0 0.0
    %275 = vmatpush1.msra.mxu0 %v98
    %276 = vmatprep.subr.mxu0 0.0
    %277 = vmatpush1.msra.mxu0 %v99
    %278 = vmatprep.subr.mxu0 0.0
    %279 = vmatpush1.msra.mxu0 %v100
    %280 = vmatprep.subr.mxu0 0.0
    %281 = vmatpush1.msra.mxu0 %v101
    %282 = vmatprep.subr.mxu0 0.0
    %283 = vmatpush1.msra.mxu0 %v102
    %284 = vmatprep.subr.mxu0 0.0
    %285 = vmatpush1.msra.mxu0 %v103
    %286 = vmatprep.subr.mxu0 0.0
    %287 = vmatpush1.msra.mxu0 %v104
    %288 = vmatprep.subr.mxu0 0.0
    %289 = vmatpush1.msra.mxu0 %v105
    %290 = vmatprep.subr.mxu0 0.0
    %291 = vmatpush1.msra.mxu0 %v106
    %292 = vmatprep.subr.mxu0 0.0
    %293 = vmatpush1.msra.mxu0 %v107
    %294 = vmatprep.subr.mxu0 0.0
    %295 = vmatpush1.msra.mxu0 %v108
    %296 = vmatprep.subr.mxu0 0.0
    %297 = vmatpush1.msra.mxu0 %v109
    %298 = vmatprep.subr.mxu0 0.0
    %299 = vmatpush1.msra.mxu0 %v110
    %300 = vmatprep.subr.mxu0 0.0
    %301 = vmatpush1.msra.mxu0 %v111
    %302 = vmatprep.subr.mxu0 0.0
    %303 = vmatpush1.msra.mxu0 %v112
    %304 = vmatprep.mubr.f32.mxu0 %v158
    %305 = vmatmul.mubr.f32.gmra.mrb[0].mxu0 %v46
    %v306 = vpop.f32.mrb[0].mxu0
    %v307 = vadd.f32 %v237, %v306
    %v308 = vpop.f32.mrb[0].mxu0
    %309 = vdwg.mxu0
    %310 = vmatprep.subr.mxu0 0.0
    %311 = vmatpush1.msra.mxu0 %v113
    %312 = vmatprep.subr.mxu0 0.0
    %313 = vmatpush1.msra.mxu0 %v114
    %314 = vmatprep.subr.mxu0 0.0
    %315 = vmatpush1.msra.mxu0 %v115
    %316 = vmatprep.subr.mxu0 0.0
    %317 = vmatpush1.msra.mxu0 %v116
    %318 = vmatprep.subr.mxu0 0.0
    %319 = vmatpush1.msra.mxu0 %v117
    %320 = vmatprep.subr.mxu0 0.0
    %321 = vmatpush1.msra.mxu0 %v118
    %322 = vmatprep.subr.mxu0 0.0
    %323 = vmatpush1.msra.mxu0 %v119
    %324 = vmatprep.subr.mxu0 0.0
    %325 = vmatpush1.msra.mxu0 %v120
    %326 = vmatprep.subr.mxu0 0.0
    %327 = vmatpush1.msra.mxu0 %v121
    %328 = vmatprep.subr.mxu0 0.0
    %329 = vmatpush1.msra.mxu0 %v122
    %330 = vmatprep.subr.mxu0 0.0
    %331 = vmatpush1.msra.mxu0 %v123
    %332 = vmatprep.subr.mxu0 0.0
    %333 = vmatpush1.msra.mxu0 %v124
    %334 = vmatprep.subr.mxu0 0.0
    %335 = vmatpush1.msra.mxu0 %v125
    %336 = vmatprep.subr.mxu0 0.0
    %337 = vmatpush1.msra.mxu0 %v126
    %338 = vmatprep.subr.mxu0 0.0
    %339 = vmatpush1.msra.mxu0 %v127
    %340 = vmatprep.subr.mxu0 0.0
    %341 = vmatpush1.msra.mxu0 %v128
    %342 = vmatprep.subr.mxu0 0.0
    %343 = vmatpush1.msra.mxu0 %v129
    %344 = vmatprep.subr.mxu0 0.0
    %345 = vmatpush1.msra.mxu0 %v130
    %346 = vmatprep.subr.mxu0 0.0
    %347 = vmatpush1.msra.mxu0 %v131
    %348 = vmatprep.subr.mxu0 0.0
    %349 = vmatpush1.msra.mxu0 %v132
    %350 = vmatprep.subr.mxu0 0.0
    %351 = vmatpush1.msra.mxu0 %v133
    %352 = vmatprep.subr.mxu0 0.0
    %353 = vmatpush1.msra.mxu0 %v134
    %354 = vmatprep.subr.mxu0 0.0
    %355 = vmatpush1.msra.mxu0 %v135
    %356 = vmatprep.subr.mxu0 0.0
    %357 = vmatpush1.msra.mxu0 %v136
    %358 = vmatprep.subr.mxu0 0.0
    %359 = vmatpush1.msra.mxu0 %v137
    %360 = vmatprep.subr.mxu0 0.0
    %361 = vmatpush1.msra.mxu0 %v138
    %362 = vmatprep.subr.mxu0 0.0
    %363 = vmatpush1.msra.mxu0 %v139
    %364 = vmatprep.subr.mxu0 0.0
    %365 = vmatpush1.msra.mxu0 %v140
    %366 = vmatprep.subr.mxu0 0.0
    %367 = vmatpush1.msra.mxu0 %v141
    %368 = vmatprep.subr.mxu0 0.0
    %369 = vmatpush1.msra.mxu0 %v142
    %370 = vmatprep.subr.mxu0 0.0
    %371 = vmatpush1.msra.mxu0 %v143
    %372 = vmatprep.subr.mxu0 0.0
    %373 = vmatpush1.msra.mxu0 %v144
    %374 = vmatprep.mubr.f32.mxu0 %v159
    %375 = vmatmul.mubr.f32.gmra.mrb[0].mxu0 %v47
    %v376 = vpop.f32.mrb[0].mxu0
    %v377 = vadd.f32 %v307, %v376
    %v378 = vpop.f32.mrb[0].mxu0
    %379 = vdwg.mxu0
    %380 = vmatprep.subr.mxu0 0.0
    %381 = vmatpush1.msra.mxu0 %v168
    %382 = vmatprep.subr.mxu0 0.0
    %383 = vmatpush1.msra.mxu0 0.0
    %384 = vmatprep.subr.mxu0 0.0
    %385 = vmatpush1.msra.mxu0 0.0
    %386 = vmatprep.subr.mxu0 0.0
    %387 = vmatpush1.msra.mxu0 0.0
    %388 = vmatprep.subr.mxu0 0.0
    %389 = vmatpush1.msra.mxu0 0.0
    %390 = vmatprep.subr.mxu0 0.0
    %391 = vmatpush1.msra.mxu0 0.0
    %392 = vmatprep.subr.mxu0 0.0
    %393 = vmatpush1.msra.mxu0 0.0
    %394 = vmatprep.subr.mxu0 0.0
    %395 = vmatpush1.msra.mxu0 0.0
    %396 = vmatprep.subr.mxu0 0.0
    %397 = vmatpush1.msra.mxu0 0.0
    %398 = vmatprep.subr.mxu0 0.0
    %399 = vmatpush1.msra.mxu0 0.0
    %400 = vmatprep.subr.mxu0 0.0
    %401 = vmatpush1.msra.mxu0 0.0
    %402 = vmatprep.subr.mxu0 0.0
    %403 = vmatpush1.msra.mxu0 0.0
    %404 = vmatprep.subr.mxu0 0.0
    %405 = vmatpush1.msra.mxu0 0.0
    %406 = vmatprep.subr.mxu0 0.0
    %407 = vmatpush1.msra.mxu0 0.0
    %408 = vmatprep.subr.mxu0 0.0
    %409 = vmatpush1.msra.mxu0 0.0
    %410 = vmatprep.subr.mxu0 0.0
    %411 = vmatpush1.msra.mxu0 0.0
    %412 = vmatprep.subr.mxu0 0.0
    %413 = vmatpush1.msra.mxu0 0.0
    %414 = vmatprep.subr.mxu0 0.0
    %415 = vmatpush1.msra.mxu0 0.0
    %416 = vmatprep.subr.mxu0 0.0
    %417 = vmatpush1.msra.mxu0 0.0
    %418 = vmatprep.subr.mxu0 0.0
    %419 = vmatpush1.msra.mxu0 0.0
    %420 = vmatprep.subr.mxu0 0.0
    %421 = vmatpush1.msra.mxu0 0.0
    %422 = vmatprep.subr.mxu0 0.0
    %423 = vmatpush1.msra.mxu0 0.0
    %424 = vmatprep.subr.mxu0 0.0
    %425 = vmatpush1.msra.mxu0 0.0
    %426 = vmatprep.subr.mxu0 0.0
    %427 = vmatpush1.msra.mxu0 0.0
    %428 = vmatprep.subr.mxu0 0.0
    %429 = vmatpush1.msra.mxu0 0.0
    %430 = vmatprep.subr.mxu0 0.0
    %431 = vmatpush1.msra.mxu0 0.0
    %432 = vmatprep.subr.mxu0 0.0
    %433 = vmatpush1.msra.mxu0 0.0
    %434 = vmatprep.subr.mxu0 0.0
    %435 = vmatpush1.msra.mxu0 0.0
    %436 = vmatprep.subr.mxu0 0.0
    %437 = vmatpush1.msra.mxu0 0.0
    %438 = vmatprep.subr.mxu0 0.0
    %439 = vmatpush1.msra.mxu0 0.0
    %440 = vmatprep.subr.mxu0 0.0
    %441 = vmatpush1.msra.mxu0 0.0
    %442 = vmatprep.subr.mxu0 0.0
    %443 = vmatpush1.msra.mxu0 0.0
    %444 = vmatprep.mubr.f32.mxu0 0.0
    %445 = vmatmul.mubr.f32.gmra.mrb[0].mxu0 %v164
    %v446 = vpop.f32.mrb[0].mxu0
    %v447 = vadd.f32 %v377, %v446
    %v448 = vpop.f32.mrb[0].mxu0
    %449 = vdwg.mxu0
    %v450 = vmax.f32 %v447, 0.0
    %v451 = vld [vmem:[%s3] sm:$0xff]
    %v452 = vld [vmem:[%s3 + $0x8] sm:$0xf]
    %v453 = vld [vmem:[%s4] sm:$0x1]
    %v455 = vlaneseq
    %v456 = vshrl.u32 %v455, 7
    %v457 = vsub.s32 0, %v456
    %v458 = vrot.slane %v453, %v457
    %vm460 = vcmask 97280
    %v462 = vsel %vm460, %v450, 0
    %vm464 = vcmask 1043456
    %v466 = vsel %vm464, %v452, 0
    %468 = vmatprep.subr.mxu0 0.0
    %469 = vmatpush1.msra.mxu0 %v451
    %470 = vmatprep.subr.mxu0 0.0
    %471 = vmatpush1.msra.mxu0 %v466
    %472 = vmatprep.subr.mxu0 0.0
    %473 = vmatpush1.msra.mxu0 0.0
    %474 = vmatprep.subr.mxu0 0.0
    %475 = vmatpush1.msra.mxu0 0.0
    %476 = vmatprep.subr.mxu0 0.0
    %477 = vmatpush1.msra.mxu0 0.0
    %478 = vmatprep.subr.mxu0 0.0
    %479 = vmatpush1.msra.mxu0 0.0
    %480 = vmatprep.subr.mxu0 0.0
    %481 = vmatpush1.msra.mxu0 0.0
    %482 = vmatprep.subr.mxu0 0.0
    %483 = vmatpush1.msra.mxu0 0.0
    %484 = vmatprep.subr.mxu0 0.0
    %485 = vmatpush1.msra.mxu0 0.0
    %486 = vmatprep.subr.mxu0 0.0
    %487 = vmatpush1.msra.mxu0 0.0
    %488 = vmatprep.subr.mxu0 0.0
    %489 = vmatpush1.msra.mxu0 0.0
    %490 = vmatprep.subr.mxu0 0.0
    %491 = vmatpush1.msra.mxu0 0.0
    %492 = vmatprep.subr.mxu0 0.0
    %493 = vmatpush1.msra.mxu0 0.0
    %494 = vmatprep.subr.mxu0 0.0
    %495 = vmatpush1.msra.mxu0 0.0
    %496 = vmatprep.subr.mxu0 0.0
    %497 = vmatpush1.msra.mxu0 0.0
    %498 = vmatprep.subr.mxu0 0.0
    %499 = vmatpush1.msra.mxu0 0.0
    %500 = vmatprep.subr.mxu0 0.0
    %501 = vmatpush1.msra.mxu0 0.0
    %502 = vmatprep.subr.mxu0 0.0
    %503 = vmatpush1.msra.mxu0 0.0
    %504 = vmatprep.subr.mxu0 0.0
    %505 = vmatpush1.msra.mxu0 0.0
    %506 = vmatprep.subr.mxu0 0.0
    %507 = vmatpush1.msra.mxu0 0.0
    %508 = vmatprep.subr.mxu0 0.0
    %509 = vmatpush1.msra.mxu0 0.0
    %510 = vmatprep.subr.mxu0 0.0
    %511 = vmatpush1.msra.mxu0 0.0
    %512 = vmatprep.subr.mxu0 0.0
    %513 = vmatpush1.msra.mxu0 0.0
    %514 = vmatprep.subr.mxu0 0.0
    %515 = vmatpush1.msra.mxu0 0.0
    %516 = vmatprep.subr.mxu0 0.0
    %517 = vmatpush1.msra.mxu0 0.0
    %518 = vmatprep.subr.mxu0 0.0
    %519 = vmatpush1.msra.mxu0 0.0
    %520 = vmatprep.subr.mxu0 0.0
    %521 = vmatpush1.msra.mxu0 0.0
    %522 = vmatprep.subr.mxu0 0.0
    %523 = vmatpush1.msra.mxu0 0.0
    %524 = vmatprep.subr.mxu0 0.0
    %525 = vmatpush1.msra.mxu0 0.0
    %526 = vmatprep.subr.mxu0 0.0
    %527 = vmatpush1.msra.mxu0 0.0
    %528 = vmatprep.subr.mxu0 0.0
    %529 = vmatpush1.msra.mxu0 0.0
    %530 = vmatprep.subr.mxu0 0.0
    %531 = vmatpush1.msra.mxu0 0.0
    %532 = vmatprep.mubr.f32.mxu0 0.0
    %533 = vmatmul.mubr.f32.gmra.mrb[0].mxu0 %v462
    %v534 = vpop.f32.mrb[0].mxu0
    %v535 = vadd.f32 %v458, %v534
    %v536 = vpop.f32.mrb[0].mxu0
    %537 = vdwg.mxu0
    %v538 = vmax.f32 %v535, 0.0
    %v539 = vld [vmem:[%s5] sm:$0xff]
    %v540 = vld [vmem:[%s6] sm:$0x1]
    %v542 = vlaneseq
    %v543 = vshrl.u32 %v542, 7
    %v544 = vsub.s32 0, %v543
    %v545 = vrot.slane %v540, %v544
    %vm547 = vcmask 64512
    %v549 = vsel %vm547, %v538, 0
    %551 = vmatprep.subr.mxu0 0.0
    %552 = vmatpush1.msra.mxu0 %v539
    %553 = vmatprep.subr.mxu0 0.0
    %554 = vmatpush1.msra.mxu0 0.0
    %555 = vmatprep.subr.mxu0 0.0
    %556 = vmatpush1.msra.mxu0 0.0
    %557 = vmatprep.subr.mxu0 0.0
    %558 = vmatpush1.msra.mxu0 0.0
    %559 = vmatprep.subr.mxu0 0.0
    %560 = vmatpush1.msra.mxu0 0.0
    %561 = vmatprep.subr.mxu0 0.0
    %562 = vmatpush1.msra.mxu0 0.0
    %563 = vmatprep.subr.mxu0 0.0
    %564 = vmatpush1.msra.mxu0 0.0
    %565 = vmatprep.subr.mxu0 0.0
    %566 = vmatpush1.msra.mxu0 0.0
    %567 = vmatprep.subr.mxu0 0.0
    %568 = vmatpush1.msra.mxu0 0.0
    %569 = vmatprep.subr.mxu0 0.0
    %570 = vmatpush1.msra.mxu0 0.0
    %571 = vmatprep.subr.mxu0 0.0
    %572 = vmatpush1.msra.mxu0 0.0
    %573 = vmatprep.subr.mxu0 0.0
    %574 = vmatpush1.msra.mxu0 0.0
    %575 = vmatprep.subr.mxu0 0.0
    %576 = vmatpush1.msra.mxu0 0.0
    %577 = vmatprep.subr.mxu0 0.0
    %578 = vmatpush1.msra.mxu0 0.0
    %579 = vmatprep.subr.mxu0 0.0
    %580 = vmatpush1.msra.mxu0 0.0
    %581 = vmatprep.subr.mxu0 0.0
    %582 = vmatpush1.msra.mxu0 0.0
    %583 = vmatprep.subr.mxu0 0.0
    %584 = vmatpush1.msra.mxu0 0.0
    %585 = vmatprep.subr.mxu0 0.0
    %586 = vmatpush1.msra.mxu0 0.0
    %587 = vmatprep.subr.mxu0 0.0
    %588 = vmatpush1.msra.mxu0 0.0
    %589 = vmatprep.subr.mxu0 0.0
    %590 = vmatpush1.msra.mxu0 0.0
    %591 = vmatprep.subr.mxu0 0.0
    %592 = vmatpush1.msra.mxu0 0.0
    %593 = vmatprep.subr.mxu0 0.0
    %594 = vmatpush1.msra.mxu0 0.0
    %595 = vmatprep.subr.mxu0 0.0
    %596 = vmatpush1.msra.mxu0 0.0
    %597 = vmatprep.subr.mxu0 0.0
    %598 = vmatpush1.msra.mxu0 0.0
    %599 = vmatprep.subr.mxu0 0.0
    %600 = vmatpush1.msra.mxu0 0.0
    %601 = vmatprep.subr.mxu0 0.0
    %602 = vmatpush1.msra.mxu0 0.0
    %603 = vmatprep.subr.mxu0 0.0
    %604 = vmatpush1.msra.mxu0 0.0
    %605 = vmatprep.subr.mxu0 0.0
    %606 = vmatpush1.msra.mxu0 0.0
    %607 = vmatprep.subr.mxu0 0.0
    %608 = vmatpush1.msra.mxu0 0.0
    %609 = vmatprep.subr.mxu0 0.0
    %610 = vmatpush1.msra.mxu0 0.0
    %611 = vmatprep.subr.mxu0 0.0
    %612 = vmatpush1.msra.mxu0 0.0
    %613 = vmatprep.subr.mxu0 0.0
    %614 = vmatpush1.msra.mxu0 0.0
    %615 = vmatprep.mubr.f32.mxu0 0.0
    %616 = vmatmul.mubr.f32.gmra.mrb[0].mxu0 %v549
    %v617 = vpop.f32.mrb[0].mxu0
    %v618 = vadd.f32 %v545, %v617
    %v619 = vpop.f32.mrb[0].mxu0
    %620 = vdwg.mxu0
    %v621 = vld [vmem:[%s7] sm:$0xf]
    %v622 = vld [vmem:[%s8] sm:$0x1]
    %v624 = vlaneseq
    %v625 = vshrl.u32 %v624, 7
    %v626 = vsub.s32 0, %v625
    %v627 = vrot.slane %v622, %v626
    %vm629 = vcmask 31744
    %v631 = vsel %vm629, %v618, 0
    %v634 = vsel %vm464, %v621, 0
    %636 = vmatprep.subr.mxu0 0.0
    %637 = vmatpush1.msra.mxu0 %v634
    %638 = vmatprep.subr.mxu0 0.0
    %639 = vmatpush1.msra.mxu0 0.0
    %640 = vmatprep.subr.mxu0 0.0
    %641 = vmatpush1.msra.mxu0 0.0
    %642 = vmatprep.subr.mxu0 0.0
    %643 = vmatpush1.msra.mxu0 0.0
    %644 = vmatprep.subr.mxu0 0.0
    %645 = vmatpush1.msra.mxu0 0.0
    %646 = vmatprep.subr.mxu0 0.0
    %647 = vmatpush1.msra.mxu0 0.0
    %648 = vmatprep.subr.mxu0 0.0
    %649 = vmatpush1.msra.mxu0 0.0
    %650 = vmatprep.subr.mxu0 0.0
    %651 = vmatpush1.msra.mxu0 0.0
    %652 = vmatprep.subr.mxu0 0.0
    %653 = vmatpush1.msra.mxu0 0.0
    %654 = vmatprep.subr.mxu0 0.0
    %655 = vmatpush1.msra.mxu0 0.0
    %656 = vmatprep.subr.mxu0 0.0
    %657 = vmatpush1.msra.mxu0 0.0
    %658 = vmatprep.subr.mxu0 0.0
    %659 = vmatpush1.msra.mxu0 0.0
    %660 = vmatprep.subr.mxu0 0.0
    %661 = vmatpush1.msra.mxu0 0.0
    %662 = vmatprep.subr.mxu0 0.0
    %663 = vmatpush1.msra.mxu0 0.0
    %664 = vmatprep.subr.mxu0 0.0
    %665 = vmatpush1.msra.mxu0 0.0
    %666 = vmatprep.subr.mxu0 0.0
    %667 = vmatpush1.msra.mxu0 0.0
    %668 = vmatprep.subr.mxu0 0.0
    %669 = vmatpush1.msra.mxu0 0.0
    %670 = vmatprep.subr.mxu0 0.0
    %671 = vmatpush1.msra.mxu0 0.0
    %672 = vmatprep.subr.mxu0 0.0
    %673 = vmatpush1.msra.mxu0 0.0
    %674 = vmatprep.subr.mxu0 0.0
    %675 = vmatpush1.msra.mxu0 0.0
    %676 = vmatprep.subr.mxu0 0.0
    %677 = vmatpush1.msra.mxu0 0.0
    %678 = vmatprep.subr.mxu0 0.0
    %679 = vmatpush1.msra.mxu0 0.0
    %680 = vmatprep.subr.mxu0 0.0
    %681 = vmatpush1.msra.mxu0 0.0
    %682 = vmatprep.subr.mxu0 0.0
    %683 = vmatpush1.msra.mxu0 0.0
    %684 = vmatprep.subr.mxu0 0.0
    %685 = vmatpush1.msra.mxu0 0.0
    %686 = vmatprep.subr.mxu0 0.0
    %687 = vmatpush1.msra.mxu0 0.0
    %688 = vmatprep.subr.mxu0 0.0
    %689 = vmatpush1.msra.mxu0 0.0
    %690 = vmatprep.subr.mxu0 0.0
    %691 = vmatpush1.msra.mxu0 0.0
    %692 = vmatprep.subr.mxu0 0.0
    %693 = vmatpush1.msra.mxu0 0.0
    %694 = vmatprep.subr.mxu0 0.0
    %695 = vmatpush1.msra.mxu0 0.0
    %696 = vmatprep.subr.mxu0 0.0
    %697 = vmatpush1.msra.mxu0 0.0
    %698 = vmatprep.subr.mxu0 0.0
    %699 = vmatpush1.msra.mxu0 0.0
    %700 = vmatprep.mubr.f32.mxu0 0.0
    %701 = vmatmul.mubr.f32.gmra.mrb[0].mxu0 %v631
    %v702 = vpop.f32.mrb[0].mxu0
    %v703 = vadd.f32 %v627, %v702
    %v704 = vpop.f32.mrb[0].mxu0
    %705 = vdwg.mxu0
    %v706 = vmax.f32 %v703, 0.0
    %v707 = vld [vmem:[%s9] sm:$0xff]
    %v708 = vld [vmem:[%s10] sm:$0x1]
    %v710 = vlaneseq
    %v711 = vshrl.u32 %v710, 7
    %v712 = vsub.s32 0, %v711
    %v713 = vrot.slane %v708, %v712
    %v716 = vsel %vm547, %v706, 0
    %718 = vmatprep.subr.mxu0 0.0
    %719 = vmatpush1.msra.mxu0 %v707
    %720 = vmatprep.subr.mxu0 0.0
    %721 = vmatpush1.msra.mxu0 0.0
    %722 = vmatprep.subr.mxu0 0.0
    %723 = vmatpush1.msra.mxu0 0.0
    %724 = vmatprep.subr.mxu0 0.0
    %725 = vmatpush1.msra.mxu0 0.0
    %726 = vmatprep.subr.mxu0 0.0
    %727 = vmatpush1.msra.mxu0 0.0
    %728 = vmatprep.subr.mxu0 0.0
    %729 = vmatpush1.msra.mxu0 0.0
    %730 = vmatprep.subr.mxu0 0.0
    %731 = vmatpush1.msra.mxu0 0.0
    %732 = vmatprep.subr.mxu0 0.0
    %733 = vmatpush1.msra.mxu0 0.0
    %734 = vmatprep.subr.mxu0 0.0
    %735 = vmatpush1.msra.mxu0 0.0
    %736 = vmatprep.subr.mxu0 0.0
    %737 = vmatpush1.msra.mxu0 0.0
    %738 = vmatprep.subr.mxu0 0.0
    %739 = vmatpush1.msra.mxu0 0.0
    %740 = vmatprep.subr.mxu0 0.0
    %741 = vmatpush1.msra.mxu0 0.0
    %742 = vmatprep.subr.mxu0 0.0
    %743 = vmatpush1.msra.mxu0 0.0
    %744 = vmatprep.subr.mxu0 0.0
    %745 = vmatpush1.msra.mxu0 0.0
    %746 = vmatprep.subr.mxu0 0.0
    %747 = vmatpush1.msra.mxu0 0.0
    %748 = vmatprep.subr.mxu0 0.0
    %749 = vmatpush1.msra.mxu0 0.0
    %750 = vmatprep.subr.mxu0 0.0
    %751 = vmatpush1.msra.mxu0 0.0
    %752 = vmatprep.subr.mxu0 0.0
    %753 = vmatpush1.msra.mxu0 0.0
    %754 = vmatprep.subr.mxu0 0.0
    %755 = vmatpush1.msra.mxu0 0.0
    %756 = vmatprep.subr.mxu0 0.0
    %757 = vmatpush1.msra.mxu0 0.0
    %758 = vmatprep.subr.mxu0 0.0
    %759 = vmatpush1.msra.mxu0 0.0
    %760 = vmatprep.subr.mxu0 0.0
    %761 = vmatpush1.msra.mxu0 0.0
    %762 = vmatprep.subr.mxu0 0.0
    %763 = vmatpush1.msra.mxu0 0.0
    %764 = vmatprep.subr.mxu0 0.0
    %765 = vmatpush1.msra.mxu0 0.0
    %766 = vmatprep.subr.mxu0 0.0
    %767 = vmatpush1.msra.mxu0 0.0
    %768 = vmatprep.subr.mxu0 0.0
    %769 = vmatpush1.msra.mxu0 0.0
    %770 = vmatprep.subr.mxu0 0.0
    %771 = vmatpush1.msra.mxu0 0.0
    %772 = vmatprep.subr.mxu0 0.0
    %773 = vmatpush1.msra.mxu0 0.0
    %774 = vmatprep.subr.mxu0 0.0
    %775 = vmatpush1.msra.mxu0 0.0
    %776 = vmatprep.subr.mxu0 0.0
    %777 = vmatpush1.msra.mxu0 0.0
    %778 = vmatprep.subr.mxu0 0.0
    %779 = vmatpush1.msra.mxu0 0.0
    %780 = vmatprep.subr.mxu0 0.0
    %781 = vmatpush1.msra.mxu0 0.0
    %782 = vmatprep.mubr.f32.mxu0 0.0
    %783 = vmatmul.mubr.f32.gmra.mrb[0].mxu0 %v716
    %v784 = vpop.f32.mrb[0].mxu0
    %v785 = vadd.f32 %v713, %v784
    %v786 = vpop.f32.mrb[0].mxu0
    %787 = vdwg.mxu0
    %v788 = vmax.f32 %v785, 0.0
    %v789 = vld [vmem:[%s11] sm:$0xff]
    %v790 = vld [vmem:[%s11 + $0x8] sm:$0xff]
    %v791 = vld [vmem:[%s11 + $0x10] sm:$0xff]
    %v792 = vld [vmem:[%s11 + $0x18] sm:$0xff]
    %v793 = vld [vmem:[%s11 + $0x20] sm:$0xff]
    %v794 = vld [vmem:[%s11 + $0x28] sm:$0xff]
    %v795 = vld [vmem:[%s11 + $0x30] sm:$0xff]
    %v796 = vld [vmem:[%s11 + $0x38] sm:$0xf]
    %v797 = vld [vmem:[%s11 + $0x40] sm:$0xf]
    %v798 = vld [vmem:[%s11 + $0x48] sm:$0xf]
    %v799 = vld [vmem:[%s11 + $0x50] sm:$0xf]
    %v800 = vld [vmem:[%s11 + $0x58] sm:$0xf]
    %v801 = vld [vmem:[%s11 + $0x60] sm:$0xf]
    %v802 = vld [vmem:[%s11 + $0x68] sm:$0xf]
    %v803 = vld [vmem:[%s12] sm:$0x7f]
    %v805 = vlaneseq
    %v806 = vshrl.u32 %v805, 7
    %v807 = vsub.s32 0, %v806
    %v808 = vrot.slane %v803, %v807
    %v809 = vlaneseq
    %v810 = vshrl.u32 %v809, 7
    %v811 = vsub.s32 1, %v810
    %v812 = vrot.slane %v803, %v811
    %v813 = vlaneseq
    %v814 = vshrl.u32 %v813, 7
    %v815 = vsub.s32 2, %v814
    %v816 = vrot.slane %v803, %v815
    %v817 = vlaneseq
    %v818 = vshrl.u32 %v817, 7
    %v819 = vsub.s32 3, %v818
    %v820 = vrot.slane %v803, %v819
    %v821 = vlaneseq
    %v822 = vshrl.u32 %v821, 7
    %v823 = vsub.s32 4, %v822
    %v824 = vrot.slane %v803, %v823
    %v825 = vlaneseq
    %v826 = vshrl.u32 %v825, 7
    %v827 = vsub.s32 5, %v826
    %v828 = vrot.slane %v803, %v827
    %v829 = vlaneseq
    %v830 = vshrl.u32 %v829, 7
    %v831 = vsub.s32 6, %v830
    %v832 = vrot.slane %v803, %v831
    %v841 = vsel %vm460, %v788, 0
    %v844 = vsel %vm464, %v796, 0
    %v847 = vsel %vm464, %v797, 0
    %v850 = vsel %vm464, %v798, 0
    %v853 = vsel %vm464, %v799, 0
    %v856 = vsel %vm464, %v800, 0
    %v859 = vsel %vm464, %v801, 0
    %v862 = vsel %vm464, %v802, 0
    %864 = vmatprep.subr.mxu0 %v790
    %865 = vmatpush1.msra.mxu0 %v789
    %866 = vmatprep.subr.mxu0 %v847
    %867 = vmatpush1.msra.mxu0 %v844
    %868 = vmatprep.subr.mxu0 0.0
    %869 = vmatpush1.msra.mxu0 0.0
    %870 = vmatprep.subr.mxu0 0.0
    %871 = vmatpush1.msra.mxu0 0.0
    %872 = vmatprep.subr.mxu0 0.0
    %873 = vmatpush1.msra.mxu0 0.0
    %874 = vmatprep.subr.mxu0 0.0
    %875 = vmatpush1.msra.mxu0 0.0
    %876 = vmatprep.subr.mxu0 0.0
    %877 = vmatpush1.msra.mxu0 0.0
    %878 = vmatprep.subr.mxu0 0.0
    %879 = vmatpush1.msra.mxu0 0.0
    %880 = vmatprep.subr.mxu0 0.0
    %881 = vmatpush1.msra.mxu0 0.0
    %882 = vmatprep.subr.mxu0 0.0
    %883 = vmatpush1.msra.mxu0 0.0
    %884 = vmatprep.subr.mxu0 0.0
    %885 = vmatpush1.msra.mxu0 0.0
    %886 = vmatprep.subr.mxu0 0.0
    %887 = vmatpush1.msra.mxu0 0.0
    %888 = vmatprep.subr.mxu0 0.0
    %889 = vmatpush1.msra.mxu0 0.0
    %890 = vmatprep.subr.mxu0 0.0
    %891 = vmatpush1.msra.mxu0 0.0
    %892 = vmatprep.subr.mxu0 0.0
    %893 = vmatpush1.msra.mxu0 0.0
    %894 = vmatprep.subr.mxu0 0.0
    %895 = vmatpush1.msra.mxu0 0.0
    %896 = vmatprep.subr.mxu0 0.0
    %897 = vmatpush1.msra.mxu0 0.0
    %898 = vmatprep.subr.mxu0 0.0
    %899 = vmatpush1.msra.mxu0 0.0
    %900 = vmatprep.subr.mxu0 0.0
    %901 = vmatpush1.msra.mxu0 0.0
    %902 = vmatprep.subr.mxu0 0.0
    %903 = vmatpush1.msra.mxu0 0.0
    %904 = vmatprep.subr.mxu0 0.0
    %905 = vmatpush1.msra.mxu0 0.0
    %906 = vmatprep.subr.mxu0 0.0
    %907 = vmatpush1.msra.mxu0 0.0
    %908 = vmatprep.subr.mxu0 0.0
    %909 = vmatpush1.msra.mxu0 0.0
    %910 = vmatprep.subr.mxu0 0.0
    %911 = vmatpush1.msra.mxu0 0.0
    %912 = vmatprep.subr.mxu0 0.0
    %913 = vmatpush1.msra.mxu0 0.0
    %914 = vmatprep.subr.mxu0 0.0
    %915 = vmatpush1.msra.mxu0 0.0
    %916 = vmatprep.subr.mxu0 0.0
    %917 = vmatpush1.msra.mxu0 0.0
    %918 = vmatprep.subr.mxu0 0.0
    %919 = vmatpush1.msra.mxu0 0.0
    %920 = vmatprep.subr.mxu0 0.0
    %921 = vmatpush1.msra.mxu0 0.0
    %922 = vmatprep.subr.mxu0 0.0
    %923 = vmatpush1.msra.mxu0 0.0
    %924 = vmatprep.subr.mxu0 0.0
    %925 = vmatpush1.msra.mxu0 0.0
    %926 = vmatprep.subr.mxu0 0.0
    %927 = vmatpush1.msra.mxu0 0.0
    %928 = vmatprep.mubr.f32.mxu0 0.0
    %929 = vmatmul.mubr.f32.gmra.mrb[0].mxu0 %v841
    %v930 = vpop.f32.mrb[0].mxu0
    %v931 = vadd.f32 %v808, %v930
    %v932 = vpop.f32.mrb[0].mxu0
    %v933 = vadd.f32 %v812, %v932
    %934 = vdwg.mxu0
    %935 = vmatprep.subr.mxu0 %v792
    %936 = vmatpush1.msra.mxu0 %v791
    %937 = vmatprep.subr.mxu0 %v853
    %938 = vmatpush1.msra.mxu0 %v850
    %939 = vmatprep.subr.mxu0 0.0
    %940 = vmatpush1.msra.mxu0 0.0
    %941 = vmatprep.subr.mxu0 0.0
    %942 = vmatpush1.msra.mxu0 0.0
    %943 = vmatprep.subr.mxu0 0.0
    %944 = vmatpush1.msra.mxu0 0.0
    %945 = vmatprep.subr.mxu0 0.0
    %946 = vmatpush1.msra.mxu0 0.0
    %947 = vmatprep.subr.mxu0 0.0
    %948 = vmatpush1.msra.mxu0 0.0
    %949 = vmatprep.subr.mxu0 0.0
    %950 = vmatpush1.msra.mxu0 0.0
    %951 = vmatprep.subr.mxu0 0.0
    %952 = vmatpush1.msra.mxu0 0.0
    %953 = vmatprep.subr.mxu0 0.0
    %954 = vmatpush1.msra.mxu0 0.0
    %955 = vmatprep.subr.mxu0 0.0
    %956 = vmatpush1.msra.mxu0 0.0
    %957 = vmatprep.subr.mxu0 0.0
    %958 = vmatpush1.msra.mxu0 0.0
    %959 = vmatprep.subr.mxu0 0.0
    %960 = vmatpush1.msra.mxu0 0.0
    %961 = vmatprep.subr.mxu0 0.0
    %962 = vmatpush1.msra.mxu0 0.0
    %963 = vmatprep.subr.mxu0 0.0
    %964 = vmatpush1.msra.mxu0 0.0
    %965 = vmatprep.subr.mxu0 0.0
    %966 = vmatpush1.msra.mxu0 0.0
    %967 = vmatprep.subr.mxu0 0.0
    %968 = vmatpush1.msra.mxu0 0.0
    %969 = vmatprep.subr.mxu0 0.0
    %970 = vmatpush1.msra.mxu0 0.0
    %971 = vmatprep.subr.mxu0 0.0
    %972 = vmatpush1.msra.mxu0 0.0
    %973 = vmatprep.subr.mxu0 0.0
    %974 = vmatpush1.msra.mxu0 0.0
    %975 = vmatprep.subr.mxu0 0.0
    %976 = vmatpush1.msra.mxu0 0.0
    %977 = vmatprep.subr.mxu0 0.0
    %978 = vmatpush1.msra.mxu0 0.0
    %979 = vmatprep.subr.mxu0 0.0
    %980 = vmatpush1.msra.mxu0 0.0
    %981 = vmatprep.subr.mxu0 0.0
    %982 = vmatpush1.msra.mxu0 0.0
    %983 = vmatprep.subr.mxu0 0.0
    %984 = vmatpush1.msra.mxu0 0.0
    %985 = vmatprep.subr.mxu0 0.0
    %986 = vmatpush1.msra.mxu0 0.0
    %987 = vmatprep.subr.mxu0 0.0
    %988 = vmatpush1.msra.mxu0 0.0
    %989 = vmatprep.subr.mxu0 0.0
    %990 = vmatpush1.msra.mxu0 0.0
    %991 = vmatprep.subr.mxu0 0.0
    %992 = vmatpush1.msra.mxu0 0.0
    %993 = vmatprep.subr.mxu0 0.0
    %994 = vmatpush1.msra.mxu0 0.0
    %995 = vmatprep.subr.mxu0 0.0
    %996 = vmatpush1.msra.mxu0 0.0
    %997 = vmatprep.subr.mxu0 0.0
    %998 = vmatpush1.msra.mxu0 0.0
    %999 = vmatprep.mubr.f32.mxu0 0.0
    %1000 = vmatmul.mubr.f32.gmra.mrb[0].mxu0 %v841
    %v1001 = vpop.f32.mrb[0].mxu0
    %v1002 = vadd.f32 %v816, %v1001
    %v1003 = vpop.f32.mrb[0].mxu0
    %v1004 = vadd.f32 %v820, %v1003
    %1005 = vdwg.mxu0
    %1006 = vmatprep.subr.mxu0 %v794
    %1007 = vmatpush1.msra.mxu0 %v793
    %1008 = vmatprep.subr.mxu0 %v859
    %1009 = vmatpush1.msra.mxu0 %v856
    %1010 = vmatprep.subr.mxu0 0.0
    %1011 = vmatpush1.msra.mxu0 0.0
    %1012 = vmatprep.subr.mxu0 0.0
    %1013 = vmatpush1.msra.mxu0 0.0
    %1014 = vmatprep.subr.mxu0 0.0
    %1015 = vmatpush1.msra.mxu0 0.0
    %1016 = vmatprep.subr.mxu0 0.0
    %1017 = vmatpush1.msra.mxu0 0.0
    %1018 = vmatprep.subr.mxu0 0.0
    %1019 = vmatpush1.msra.mxu0 0.0
    %1020 = vmatprep.subr.mxu0 0.0
    %1021 = vmatpush1.msra.mxu0 0.0
    %1022 = vmatprep.subr.mxu0 0.0
    %1023 = vmatpush1.msra.mxu0 0.0
    %1024 = vmatprep.subr.mxu0 0.0
    %1025 = vmatpush1.msra.mxu0 0.0
    %1026 = vmatprep.subr.mxu0 0.0
    %1027 = vmatpush1.msra.mxu0 0.0
    %1028 = vmatprep.subr.mxu0 0.0
    %1029 = vmatpush1.msra.mxu0 0.0
    %1030 = vmatprep.subr.mxu0 0.0
    %1031 = vmatpush1.msra.mxu0 0.0
    %1032 = vmatprep.subr.mxu0 0.0
    %1033 = vmatpush1.msra.mxu0 0.0
    %1034 = vmatprep.subr.mxu0 0.0
    %1035 = vmatpush1.msra.mxu0 0.0
    %1036 = vmatprep.subr.mxu0 0.0
    %1037 = vmatpush1.msra.mxu0 0.0
    %1038 = vmatprep.subr.mxu0 0.0
    %1039 = vmatpush1.msra.mxu0 0.0
    %1040 = vmatprep.subr.mxu0 0.0
    %1041 = vmatpush1.msra.mxu0 0.0
    %1042 = vmatprep.subr.mxu0 0.0
    %1043 = vmatpush1.msra.mxu0 0.0
    %1044 = vmatprep.subr.mxu0 0.0
    %1045 = vmatpush1.msra.mxu0 0.0
    %1046 = vmatprep.subr.mxu0 0.0
    %1047 = vmatpush1.msra.mxu0 0.0
    %1048 = vmatprep.subr.mxu0 0.0
    %1049 = vmatpush1.msra.mxu0 0.0
    %1050 = vmatprep.subr.mxu0 0.0
    %1051 = vmatpush1.msra.mxu0 0.0
    %1052 = vmatprep.subr.mxu0 0.0
    %1053 = vmatpush1.msra.mxu0 0.0
    %1054 = vmatprep.subr.mxu0 0.0
    %1055 = vmatpush1.msra.mxu0 0.0
    %1056 = vmatprep.subr.mxu0 0.0
    %1057 = vmatpush1.msra.mxu0 0.0
    %1058 = vmatprep.subr.mxu0 0.0
    %1059 = vmatpush1.msra.mxu0 0.0
    %1060 = vmatprep.subr.mxu0 0.0
    %1061 = vmatpush1.msra.mxu0 0.0
    %1062 = vmatprep.subr.mxu0 0.0
    %1063 = vmatpush1.msra.mxu0 0.0
    %1064 = vmatprep.subr.mxu0 0.0
    %1065 = vmatpush1.msra.mxu0 0.0
    %1066 = vmatprep.subr.mxu0 0.0
    %1067 = vmatpush1.msra.mxu0 0.0
    %1068 = vmatprep.subr.mxu0 0.0
    %1069 = vmatpush1.msra.mxu0 0.0
    %1070 = vmatprep.mubr.f32.mxu0 0.0
    %1071 = vmatmul.mubr.f32.gmra.mrb[0].mxu0 %v841
    %v1072 = vpop.f32.mrb[0].mxu0
    %v1073 = vadd.f32 %v824, %v1072
    %v1074 = vpop.f32.mrb[0].mxu0
    %v1075 = vadd.f32 %v828, %v1074
    %1076 = vdwg.mxu0
    %1077 = vmatprep.subr.mxu0 0.0
    %1078 = vmatpush1.msra.mxu0 %v795
    %1079 = vmatprep.subr.mxu0 0.0
    %1080 = vmatpush1.msra.mxu0 %v862
    %1081 = vmatprep.subr.mxu0 0.0
    %1082 = vmatpush1.msra.mxu0 0.0
    %1083 = vmatprep.subr.mxu0 0.0
    %1084 = vmatpush1.msra.mxu0 0.0
    %1085 = vmatprep.subr.mxu0 0.0
    %1086 = vmatpush1.msra.mxu0 0.0
    %1087 = vmatprep.subr.mxu0 0.0
    %1088 = vmatpush1.msra.mxu0 0.0
    %1089 = vmatprep.subr.mxu0 0.0
    %1090 = vmatpush1.msra.mxu0 0.0
    %1091 = vmatprep.subr.mxu0 0.0
    %1092 = vmatpush1.msra.mxu0 0.0
    %1093 = vmatprep.subr.mxu0 0.0
    %1094 = vmatpush1.msra.mxu0 0.0
    %1095 = vmatprep.subr.mxu0 0.0
    %1096 = vmatpush1.msra.mxu0 0.0
    %1097 = vmatprep.subr.mxu0 0.0
    %1098 = vmatpush1.msra.mxu0 0.0
    %1099 = vmatprep.subr.mxu0 0.0
    %1100 = vmatpush1.msra.mxu0 0.0
    %1101 = vmatprep.subr.mxu0 0.0
    %1102 = vmatpush1.msra.mxu0 0.0
    %1103 = vmatprep.subr.mxu0 0.0
    %1104 = vmatpush1.msra.mxu0 0.0
    %1105 = vmatprep.subr.mxu0 0.0
    %1106 = vmatpush1.msra.mxu0 0.0
    %1107 = vmatprep.subr.mxu0 0.0
    %1108 = vmatpush1.msra.mxu0 0.0
    %1109 = vmatprep.subr.mxu0 0.0
    %1110 = vmatpush1.msra.mxu0 0.0
    %1111 = vmatprep.subr.mxu0 0.0
    %1112 = vmatpush1.msra.mxu0 0.0
    %1113 = vmatprep.subr.mxu0 0.0
    %1114 = vmatpush1.msra.mxu0 0.0
    %1115 = vmatprep.subr.mxu0 0.0
    %1116 = vmatpush1.msra.mxu0 0.0
    %1117 = vmatprep.subr.mxu0 0.0
    %1118 = vmatpush1.msra.mxu0 0.0
    %1119 = vmatprep.subr.mxu0 0.0
    %1120 = vmatpush1.msra.mxu0 0.0
    %1121 = vmatprep.subr.mxu0 0.0
    %1122 = vmatpush1.msra.mxu0 0.0
    %1123 = vmatprep.subr.mxu0 0.0
    %1124 = vmatpush1.msra.mxu0 0.0
    %1125 = vmatprep.subr.mxu0 0.0
    %1126 = vmatpush1.msra.mxu0 0.0
    %1127 = vmatprep.subr.mxu0 0.0
    %1128 = vmatpush1.msra.mxu0 0.0
    %1129 = vmatprep.subr.mxu0 0.0
    %1130 = vmatpush1.msra.mxu0 0.0
    %1131 = vmatprep.subr.mxu0 0.0
    %1132 = vmatpush1.msra.mxu0 0.0
    %1133 = vmatprep.subr.mxu0 0.0
    %1134 = vmatpush1.msra.mxu0 0.0
    %1135 = vmatprep.subr.mxu0 0.0
    %1136 = vmatpush1.msra.mxu0 0.0
    %1137 = vmatprep.subr.mxu0 0.0
    %1138 = vmatpush1.msra.mxu0 0.0
    %1139 = vmatprep.subr.mxu0 0.0
    %1140 = vmatpush1.msra.mxu0 0.0
    %1141 = vmatprep.mubr.f32.mxu0 0.0
    %1142 = vmatmul.mubr.f32.gmra.mrb[0].mxu0 %v841
    %v1143 = vpop.f32.mrb[0].mxu0
    %v1144 = vadd.f32 %v832, %v1143
    %v1145 = vpop.f32.mrb[0].mxu0
    %1146 = vdwg.mxu0
    %v1147 = vxor.u32 %v931, 2147483648
    %v1148 = vxor.u32 %v933, 2147483648
    %v1149 = vxor.u32 %v1002, 2147483648
    %v1150 = vxor.u32 %v1004, 2147483648
    %v1151 = vxor.u32 %v1073, 2147483648
    %v1152 = vxor.u32 %v1075, 2147483648
    %v1153 = vxor.u32 %v1144, 2147483648
    %v1154 = vmul.f32 %v1147, 1.442695
    %v1155 = vpow.pop %v1154
    %v1156 = vmul.f32 %v1148, 1.442695
    %v1157 = vpow.pop %v1156
    %v1158 = vmul.f32 %v1149, 1.442695
    %v1159 = vpow.pop %v1158
    %v1160 = vmul.f32 %v1150, 1.442695
    %v1161 = vpow.pop %v1160
    %v1162 = vmul.f32 %v1151, 1.442695
    %v1163 = vpow.pop %v1162
    %v1164 = vmul.f32 %v1152, 1.442695
    %v1165 = vpow.pop %v1164
    %v1166 = vmul.f32 %v1153, 1.442695
    %v1167 = vpow.pop %v1166
    %v1168 = vadd.f32 %v1155, 1.0
    %v1169 = vadd.f32 %v1157, 1.0
    %v1170 = vadd.f32 %v1159, 1.0
    %v1171 = vadd.f32 %v1161, 1.0
    %v1172 = vadd.f32 %v1163, 1.0
    %v1173 = vadd.f32 %v1165, 1.0
    %v1174 = vadd.f32 %v1167, 1.0
    %v1175 = vrcp.pop %v1168
    %v1176 = vmul.f32 1.0, %v1175
    %v1177 = vrcp.pop %v1169
    %v1178 = vmul.f32 1.0, %v1177
    %v1179 = vrcp.pop %v1170
    %v1180 = vmul.f32 1.0, %v1179
    %v1181 = vrcp.pop %v1171
    %v1182 = vmul.f32 1.0, %v1181
    %v1183 = vrcp.pop %v1172
    %v1184 = vmul.f32 1.0, %v1183
    %v1185 = vrcp.pop %v1173
    %v1186 = vmul.f32 1.0, %v1185
    %v1187 = vrcp.pop %v1174
    %v1188 = vmul.f32 1.0, %v1187
    %v1195 = vcombine.low %v1176, %v1178
    %v1196 = vcombine.low %v1180, %v1182
    %v1197 = vcombine.low %v1184, %v1186
    %1201 = vst [vmem:[#allocation2] sm:$0xff] %v1195
    %1202 = vst [vmem:[#allocation2 + $0x8] sm:$0xff] %v1196
    %1203 = vst [vmem:[#allocation2 + $0x10] sm:$0xff] %v1197
    %vm1204 = vcmask 35840
    %1205 = vst.msk [vmem:[#allocation2 + $0x18] sm:$0xf] %vm1204, %v1188
    // Predicated region
    $region54: #{tpu_custom_call.1} parent=1 // pred_check
      _
    $region55: #{tpu_custom_call.1} parent=1 // pred_check_branch
      %1207 = sbr.rel (0) target = $region57
    $region56: #{tpu_custom_call.1} parent=1 // pred_region
      %s1209 = ssub.s32 448, 448
      %1210 = vsyncadd [#allocation3], %s1209
      %s1212 = sshll.u32 [#allocation2], 4
      %s1213 = int_to_ptr.vmem [resolvable:$true] %s1212
      %1215 = dma.vmem_to_hbm [thread:$0]  %s1213, 448, %s13, [#allocation3]
    $region57: #{tpu_custom_call.1} parent=1 // pred_fallthru
      _
    // Predicated region
    $region58: #{tpu_custom_call.1} parent=1 // pred_check
      _
    $region59: #{tpu_custom_call.1} parent=1 // pred_check_branch
      %1217 = sbr.rel (0) target = $region61
    $region60: #{tpu_custom_call.1} parent=1 // pred_region
      %1218 = dma.done [#allocation3], 448
    $region61: #{tpu_custom_call.1} parent=1 // pred_fallthru
      _
    %1219 = vsyncpa [#allocation3], 1

</llo_original>
